<compile_context>
chip_gen: v7x
topology: tpu7x:2x2x1
jax: 0.10.0
libtpu: 0.0.40
codegen_flags: <defaults>
</compile_context>

<pallas_src>
import jax
import jax.numpy as jnp
from jax.experimental import pallas as pl
from jax.experimental.pallas import tpu as pltpu


def _gelu_new(x):
    # GPT-2 "gelu_new" (tanh approximation), matching transformers NewGELUActivation.
    c = 0.7978845608028654  # sqrt(2 / pi)
    return 0.5 * x * (1.0 + jnp.tanh(c * (x + 0.044715 * x * x * x)))


def _gpt2_mlp_kernel(x_ref, w1_ref, b1_ref, w2_ref, b2_ref, o_ref, acc_ref):
    """One (row-tile i, intermediate-chunk k) step of
       out = gelu_new(x @ W1 + b1) @ W2 + b2.

    x_ref:  (tm, H)   bf16 row tile (resident across the k sweep)
    w1_ref: (H, ik)   bf16 c_fc weight chunk
    b1_ref: (1, ik)   f32  c_fc bias chunk
    w2_ref: (ik, H)   bf16 c_proj weight chunk
    b2_ref: (1, H)    f32  c_proj bias
    o_ref:  (tm, H)   output tile (written at the last k chunk)
    acc_ref:(tm, H)   f32 VMEM scratch accumulator
    """
    k = pl.program_id(1)
    nk = pl.num_programs(1)

    @pl.when(k == 0)
    def _():
        acc_ref[...] = jnp.zeros_like(acc_ref)

    # c_fc chunk: (tm, H) @ (H, ik) on the MXU, f32 accumulate + f32 bias + gelu.
    h = jnp.dot(x_ref[...], w1_ref[...], preferred_element_type=jnp.float32)
    h = _gelu_new(h + b1_ref[...])
    # c_proj chunk: (tm, ik) @ (ik, H), accumulated on-chip in f32 scratch.
    acc_ref[...] += jnp.dot(h.astype(w2_ref.dtype), w2_ref[...],
                            preferred_element_type=jnp.float32)

    @pl.when(k == nk - 1)
    def _():
        # dropout(resid_pdrop): identity in eval/inference mode.
        o_ref[...] = (acc_ref[...] + b2_ref[...]).astype(o_ref.dtype)


def _round_up(x, m):
    return ((x + m - 1) // m) * m


def _vmem_capacity_bytes(default=64 * 2**20):
    try:
        cap = getattr(pltpu.get_tpu_info(), "vmem_capacity_bytes", None)
        if cap:
            return int(cap)
    except Exception:
        pass
    return default


def gpt2_mlp(hidden_states, w_fc, b_fc, w_proj, b_proj, *,
             tm=512, ik=512, compute_dtype=jnp.bfloat16, out_dtype=None):
    """Fused GPT-2 MLP: dropout(gelu_new(x @ W_fc + b_fc) @ W_proj + b_proj).

    hidden_states: (B, S, H). w_fc: (H, I), b_fc: (I,), w_proj: (I, H),
    b_proj: (H,). Returns (B, S, H) in `out_dtype` (default: input dtype).

    compute_dtype: MXU input dtype (bf16 by default, f32 accumulation) -
    explicit knob, since pure-f32 PyTorch reference will differ at ~1e-3.
    """
    B, S, H = hidden_states.shape
    I = w_fc.shape[1]
    M = B * S
    out_dtype = hidden_states.dtype if out_dtype is None else out_dtype

    # --- lane-dim padding: H and I to multiples of 128 (unmasked stores, clean
    # MXU N/K tiling). Padded rows/cols are zero and sliced off at the end.
    H_pad = _round_up(H, 128)
    I_pad = _round_up(I, 128)

    # Intermediate-dim chunk width: multiple of 128, no ragged last chunk.
    ik_eff = max(128, _round_up(min(ik, I_pad), 128))
    ik_eff = min(ik_eff, I_pad)
    I_pad = _round_up(I_pad, ik_eff)
    nk = I_pad // ik_eff

    # --- row tiling: multiple of 8, clamped for tiny inputs; guarantee >= 2 row
    # tiles when possible so the "parallel" axis feeds both v7x TensorCores.
    tm = _round_up(max(tm, 8), 8)
    tm_eff = min(tm, _round_up(M, 8))
    if _round_up(M, tm_eff) // tm_eff < 2 and tm_eff > 8:
        tm_eff = _round_up(max(8, tm_eff // 2), 8)
    M_pad = _round_up(M, tm_eff)
    n_row_tiles = M_pad // tm_eff

    # --- build padded operands.
    x2d = hidden_states.reshape(M, H).astype(compute_dtype)
    x2d = jnp.pad(x2d, ((0, M_pad - M), (0, H_pad - H)))
    w1 = jnp.pad(w_fc.astype(compute_dtype), ((0, H_pad - H), (0, I_pad - I)))
    w2 = jnp.pad(w_proj.astype(compute_dtype), ((0, I_pad - I), (0, H_pad - H)))
    b1 = jnp.pad(b_fc.astype(jnp.float32), (0, I_pad - I)).reshape(1, I_pad)
    b2 = jnp.pad(b_proj.astype(jnp.float32), (0, H_pad - H)).reshape(1, H_pad)

    # --- generation-aware VMEM budget (v7x: 64 MiB/TC; v5e/v6e: 128 MiB).
    bpe = jnp.dtype(compute_dtype).itemsize
    out_bpe = jnp.dtype(out_dtype).itemsize
    est = (2 * tm_eff * H_pad * bpe          # x tiles (double-buffered)
           + 2 * tm_eff * H_pad * out_bpe    # out tiles
           + 2 * H_pad * ik_eff * bpe        # W_fc chunks
           + 2 * ik_eff * H_pad * bpe        # W_proj chunks
           + 2 * (I_pad + H_pad) * 4         # biases
           + 2 * tm_eff * ik_eff * 4         # per-chunk f32 intermediate
           + tm_eff * H_pad * 4)             # f32 accumulator scratch
    cap = max(32 * 2**20, _vmem_capacity_bytes() - 8 * 2**20)
    vmem_limit = int(min(cap, max(32 * 2**20, int(1.5 * est))))

    out2d = pl.pallas_call(
        _gpt2_mlp_kernel,
        out_shape=jax.ShapeDtypeStruct((M_pad, H_pad), out_dtype),
        grid_spec=pltpu.PrefetchScalarGridSpec(
            num_scalar_prefetch=0,
            grid=(n_row_tiles, nk),
            in_specs=[
                pl.BlockSpec((tm_eff, H_pad), lambda i, k: (i, 0)),  # x row tile
                pl.BlockSpec((H_pad, ik_eff), lambda i, k: (0, k)),  # W_fc chunk
                pl.BlockSpec((1, ik_eff), lambda i, k: (0, k)),      # b_fc chunk
                pl.BlockSpec((ik_eff, H_pad), lambda i, k: (k, 0)),  # W_proj chunk
                pl.BlockSpec((1, H_pad), lambda i, k: (0, 0)),       # b_proj
            ],
            out_specs=pl.BlockSpec((tm_eff, H_pad), lambda i, k: (i, 0)),
            scratch_shapes=[pltpu.VMEM((tm_eff, H_pad), jnp.float32)],
        ),
        compiler_params=pltpu.CompilerParams(
            # Row-tile axis is embarrassingly parallel -> megacore sharding on
            # v7x; the intermediate-chunk axis is the (innermost) reduction.
            dimension_semantics=("parallel", "arbitrary"),
            vmem_limit_bytes=vmem_limit,
        ),
    )(x2d, w1, b1, w2, b2)

    out2d = out2d[:M, :H]
    return out2d.reshape(B, S, H)


def _reference(hidden_states, w_fc, b_fc, w_proj, b_proj):
    h = hidden_states @ w_fc + b_fc
    h = _gelu_new(h)
    return h @ w_proj + b_proj


if __name__ == "__main__":
    key = jax.random.PRNGKey(0)
    k_x, k_w1, k_b1, k_w2, k_b2, k_x2 = jax.random.split(key, 6)

    # Case 1: GPT2-like toy config (hidden=32, intermediate=4*hidden), batch=2, seq=8.
    B, S, H = 2, 8, 32
    I = 4 * H
    x = jax.random.normal(k_x, (B, S, H), dtype=jnp.float32)
    # GPT-2 Conv1D init: weight ~ N(0, 0.02); small nonzero bias to exercise the add.
    w_fc = 0.02 * jax.random.normal(k_w1, (H, I), dtype=jnp.float32)
    b_fc = 0.01 * jax.random.normal(k_b1, (I,), dtype=jnp.float32)
    w_proj = 0.02 * jax.random.normal(k_w2, (I, H), dtype=jnp.float32)
    b_proj = 0.01 * jax.random.normal(k_b2, (H,), dtype=jnp.float32)

    out = jax.block_until_ready(gpt2_mlp(x, w_fc, b_fc, w_proj, b_proj))
    ref = _reference(x, w_fc, b_fc, w_proj, b_proj)
    assert out.shape == (B, S, H)
    assert out.dtype == x.dtype
    assert jnp.allclose(out, ref, atol=5e-3, rtol=5e-2), "case 1 mismatch vs reference"

    # Case 2: ragged token count (row padding) + multi-chunk reduction over the
    # intermediate dim (exercises the k grid axis / scratch accumulator path).
    B2, S2, H2, I2 = 1, 12, 32, 256
    x2 = jax.random.normal(k_x2, (B2, S2, H2), dtype=jnp.float32)
    w_fc2 = 0.02 * jax.random.normal(k_w1, (H2, I2), dtype=jnp.float32)
    b_fc2 = 0.01 * jax.random.normal(k_b1, (I2,), dtype=jnp.float32)
    w_proj2 = 0.02 * jax.random.normal(k_w2, (I2, H2), dtype=jnp.float32)
    b_proj2 = 0.01 * jax.random.normal(k_b2, (H2,), dtype=jnp.float32)

    out2 = jax.block_until_ready(
        gpt2_mlp(x2, w_fc2, b_fc2, w_proj2, b_proj2, ik=128))
    ref2 = _reference(x2, w_fc2, b_fc2, w_proj2, b_proj2)
    assert out2.shape == (B2, S2, H2)
    assert jnp.allclose(out2, ref2, atol=5e-3, rtol=5e-2), "case 2 mismatch vs reference"

    print("KERNEL_OK")
</pallas_src>

<mosaic_0001>
module attributes {stable_mosaic.version = 11 : i64} {
  func.func @_gpt2_mlp_kernel(%arg0: i32, %arg1: i32, %arg2: memref<8x128xbf16, #tpu.memory_space<vmem>>, %arg3: memref<128x128xbf16, #tpu.memory_space<vmem>>, %arg4: memref<1x128xf32, #tpu.memory_space<vmem>>, %arg5: memref<128x128xbf16, #tpu.memory_space<vmem>>, %arg6: memref<1x128xf32, #tpu.memory_space<vmem>>, %arg7: memref<8x128xf32, #tpu.memory_space<vmem>>, %arg8: memref<8x128xf32, #tpu.memory_space<vmem>>) attributes {dimension_semantics = [#tpu.dimension_semantics<parallel>, #tpu.dimension_semantics<arbitrary>], iteration_bounds = array<i64: 2, 1>, scalar_prefetch = 0 : i64, scratch_operands = 1 : i64, tpu.core_type = #tpu.core_type<tc>, window_params = [{transform_indices = @transform_0, window_bounds = array<i64: 8, 128>}, {transform_indices = @transform_1, window_bounds = array<i64: 128, 128>}, {transform_indices = @transform_2, window_bounds = array<i64: 1, 128>}, {transform_indices = @transform_3, window_bounds = array<i64: 128, 128>}, {pipeline_mode = #tpu.pipeline_mode<synchronous>, transform_indices = @transform_4, window_bounds = array<i64: 1, 128>}, {transform_indices = @transform_5, window_bounds = array<i64: 8, 128>}]} {
    %c0_i32 = arith.constant 0 : i32
    %0 = arith.cmpi eq, %arg1, %c0_i32 : i32
    %1 = arith.extui %0 : i1 to i32
    %c0_i32_0 = arith.constant 0 : i32
    %2 = arith.cmpi ne, %1, %c0_i32_0 : i32
    scf.if %2 {
      %cst_19 = arith.constant 0.000000e+00 : f32
      %31 = vector.broadcast %cst_19 : f32 to vector<8x128xf32>
      %c0_20 = arith.constant 0 : index
      %c0_21 = arith.constant 0 : index
      %32 = vector.load %arg8[%c0_20, %c0_21] : memref<8x128xf32, #tpu.memory_space<vmem>>, vector<8x128xf32>
      tpu.vector_store %arg8[%c0_20, %c0_21], %31 {strides = array<i32>} : memref<8x128xf32, #tpu.memory_space<vmem>>, vector<8x128xf32>,
    } else {
    }
    %c0 = arith.constant 0 : index
    %c0_1 = arith.constant 0 : index
    %3 = vector.load %arg2[%c0, %c0_1] : memref<8x128xbf16, #tpu.memory_space<vmem>>, vector<8x128xbf16>
    %c0_2 = arith.constant 0 : index
    %c0_3 = arith.constant 0 : index
    %4 = vector.load %arg3[%c0_2, %c0_3] : memref<128x128xbf16, #tpu.memory_space<vmem>>, vector<128x128xbf16>
    %cst = arith.constant dense<0.000000e+00> : vector<8x128xf32>
    %5 = tpu.matmul %3, %4, %cst {dimension_numbers = #tpu.dot_dimension_numbers<[1], [0], [0], [1], [0, 0, 1, 1], [], []>} : vector<8x128xbf16>, vector<128x128xbf16>, vector<8x128xf32> -> vector<8x128xf32>
    %c0_4 = arith.constant 0 : index
    %c0_5 = arith.constant 0 : index
    %6 = vector.load %arg4[%c0_4, %c0_5] : memref<1x128xf32, #tpu.memory_space<vmem>>, vector<1x128xf32>
    %7 = vector.broadcast %6 : vector<1x128xf32> to vector<8x128xf32>
    %8 = arith.addf %5, %7 : vector<8x128xf32>
    %cst_6 = arith.constant 5.000000e-01 : f32
    %9 = vector.broadcast %cst_6 : f32 to vector<8x128xf32>
    %10 = arith.mulf %9, %8 : vector<8x128xf32>
    %cst_7 = arith.constant 4.471500e-02 : f32
    %11 = vector.broadcast %cst_7 : f32 to vector<8x128xf32>
    %12 = arith.mulf %11, %8 : vector<8x128xf32>
    %13 = arith.mulf %12, %8 : vector<8x128xf32>
    %14 = arith.mulf %13, %8 : vector<8x128xf32>
    %15 = arith.addf %8, %14 : vector<8x128xf32>
    %cst_8 = arith.constant 0.797884583 : f32
    %16 = vector.broadcast %cst_8 : f32 to vector<8x128xf32>
    %17 = arith.mulf %16, %15 : vector<8x128xf32>
    %18 = math.tanh %17 : vector<8x128xf32>
    %cst_9 = arith.constant 1.000000e+00 : f32
    %19 = vector.broadcast %cst_9 : f32 to vector<8x128xf32>
    %20 = arith.addf %19, %18 : vector<8x128xf32>
    %21 = arith.mulf %10, %20 : vector<8x128xf32>
    %c0_10 = arith.constant 0 : index
    %c0_11 = arith.constant 0 : index
    %22 = vector.load %arg8[%c0_10, %c0_11] : memref<8x128xf32, #tpu.memory_space<vmem>>, vector<8x128xf32>
    %23 = arith.truncf %21 : vector<8x128xf32> to vector<8x128xbf16>
    %c0_12 = arith.constant 0 : index
    %c0_13 = arith.constant 0 : index
    %24 = vector.load %arg5[%c0_12, %c0_13] : memref<128x128xbf16, #tpu.memory_space<vmem>>, vector<128x128xbf16>
    %cst_14 = arith.constant dense<0.000000e+00> : vector<8x128xf32>
    %25 = tpu.matmul %23, %24, %cst_14 {dimension_numbers = #tpu.dot_dimension_numbers<[1], [0], [0], [1], [0, 0, 1, 1], [], []>} : vector<8x128xbf16>, vector<128x128xbf16>, vector<8x128xf32> -> vector<8x128xf32>
    %26 = arith.addf %22, %25 : vector<8x128xf32>
    %c0_15 = arith.constant 0 : index
    %c0_16 = arith.constant 0 : index
    %27 = vector.load %arg8[%c0_15, %c0_16] : memref<8x128xf32, #tpu.memory_space<vmem>>, vector<8x128xf32>
    tpu.vector_store %arg8[%c0_15, %c0_16], %26 {strides = array<i32>} : memref<8x128xf32, #tpu.memory_space<vmem>>, vector<8x128xf32>,
    %c0_i32_17 = arith.constant 0 : i32
    %28 = arith.cmpi eq, %arg1, %c0_i32_17 : i32
    %29 = arith.extui %28 : i1 to i32
    %c0_i32_18 = arith.constant 0 : i32
    %30 = arith.cmpi ne, %29, %c0_i32_18 : i32
    scf.if %30 {
      %c0_19 = arith.constant 0 : index
      %c0_20 = arith.constant 0 : index
      %31 = vector.load %arg8[%c0_19, %c0_20] : memref<8x128xf32, #tpu.memory_space<vmem>>, vector<8x128xf32>
      %c0_21 = arith.constant 0 : index
      %c0_22 = arith.constant 0 : index
      %32 = vector.load %arg6[%c0_21, %c0_22] : memref<1x128xf32, #tpu.memory_space<vmem>>, vector<1x128xf32>
      %33 = vector.broadcast %32 : vector<1x128xf32> to vector<8x128xf32>
      %34 = arith.addf %31, %33 : vector<8x128xf32>
      %c0_23 = arith.constant 0 : index
      %c0_24 = arith.constant 0 : index
      %35 = vector.load %arg7[%c0_23, %c0_24] : memref<8x128xf32, #tpu.memory_space<vmem>>, vector<8x128xf32>
      tpu.vector_store %arg7[%c0_23, %c0_24], %34 {strides = array<i32>} : memref<8x128xf32, #tpu.memory_space<vmem>>, vector<8x128xf32>,
    } else {
    }
    return
  }
  func.func @transform_0(%arg0: i32, %arg1: i32) -> (i32, i32) {
    %c0_i32 = arith.constant 0 : i32
    %c0_i32_0 = arith.constant 0 : i32
    return %arg0, %c0_i32 : i32, i32
  }
  func.func @transform_1(%arg0: i32, %arg1: i32) -> (i32, i32) {
    %c0_i32 = arith.constant 0 : i32
    %c0_i32_0 = arith.constant 0 : i32
    return %c0_i32, %arg1 : i32, i32
  }
  func.func @transform_2(%arg0: i32, %arg1: i32) -> (i32, i32) {
    %c0_i32 = arith.constant 0 : i32
    %c0_i32_0 = arith.constant 0 : i32
    return %c0_i32, %arg1 : i32, i32
  }
  func.func @transform_3(%arg0: i32, %arg1: i32) -> (i32, i32) {
    %c0_i32 = arith.constant 0 : i32
    %c0_i32_0 = arith.constant 0 : i32
    return %arg1, %c0_i32 : i32, i32
  }
  func.func @transform_4(%arg0: i32, %arg1: i32) -> (i32, i32) {
    %c0_i32 = arith.constant 0 : i32
    %c0_i32_0 = arith.constant 0 : i32
    %c0_i32_1 = arith.constant 0 : i32
    return %c0_i32, %c0_i32_0 : i32, i32
  }
  func.func @transform_5(%arg0: i32, %arg1: i32) -> (i32, i32) {
    %c0_i32 = arith.constant 0 : i32
    %c0_i32_0 = arith.constant 0 : i32
    return %arg0, %c0_i32 : i32, i32
  }
}

</mosaic_0001>

<llo_original>
// kernel: tpu_custom_call.1
$region0: #{tpu_custom_call.1}
  #allocation0 [shape = 'u32[]', space=smem, size = 0x4, offset = 0x4, fixed_abs, tag = 'smem constant byte address 0x4 - core index']
  #allocation1 [shape = 'u32[144,128]{1,0:T(1,128)}', space=vmem, size = 0x12000, scoped, tag = 'internal scratch']
  #allocation2 [shape = 'f32[8,128]{1,0:T(8,128)}', space=vmem, size = 0x1000, scoped, tag = 'scratch operand']
  %s0 = inlined_call_operand.hbm [shape: bf16[16,128], index: 0, kind: input, shape index: {}]
  %s1 = inlined_call_operand.hbm [shape: bf16[128,128], index: 1, kind: input, shape index: {}]
  %s2 = inlined_call_operand.vmem [shape: f32[1,128], index: 2, kind: input, shape index: {}]
  %s3 = inlined_call_operand.hbm [shape: bf16[128,128], index: 3, kind: input, shape index: {}]
  %s4 = inlined_call_operand.vmem [shape: f32[1,128], index: 4, kind: input, shape index: {}]
  %s5 = inlined_call_operand.hbm [shape: f32[16,128], index: 5, kind: output, shape index: {}]
  %s6 = sld [smem:[#allocation0]]
  $region73: #{tpu_custom_call.1} parent=0
    _
  %s8 = ssub.s32 1, %s6
  %s9 = scalar_select 0, %s8, %s6
  $region1: #{tpu_custom_call.1} parent=0
    #allocation3 [shape = 'u8[4096]{0}', space=vmem, size = 0x1000, scoped, tag = 'input window, operand 0']
    #allocation4 [shape = 's32[2]{0}', space=sflag, size = 0x8, scoped, tag = 'scoped memory for tpu_custom_call.1']
    #allocation5 [shape = 's32[2]{0}', space=sflag, size = 0x8, scoped, tag = 'scoped memory for tpu_custom_call.1']
    #allocation6 [shape = 'u8[32768]{0}', space=vmem, size = 0x8000, scoped, tag = 'input window, operand 1, single buffered']
    #allocation7 [shape = 's32[1]{0}', space=sflag, size = 0x4, scoped, tag = 'scoped memory for tpu_custom_call.1']
    #allocation8 [shape = 'u8[32768]{0}', space=vmem, size = 0x8000, scoped, tag = 'input window, operand 3, single buffered']
    #allocation9 [shape = 'u8[8192]{0}', space=vmem, size = 0x2000, scoped, tag = 'output window, operand 0']
    %10 = vsyncpa [#allocation4], 0
    %s11 = scalar_lea.sflag [#allocation4], 1
    %12 = vsyncpa %s11, 0
    %13 = vsyncpa [#allocation7], 0
    %14 = vsyncpa [#allocation5], 0
    %s15 = scalar_lea.sflag [#allocation5], 1
    %16 = vsyncpa %s15, 0
    loop: start=0, step=1, limit=4
    $region2: #{tpu_custom_call.1} parent=1 // loop_pre_header
      _
    $region3: #{tpu_custom_call.1} parent=1 // loop_header
      %s18 = sphi 0, %s22
      %p19 = scmp.ge.s32.totalorder %s18, 4
      %s25 = sphi 0, %s37
      %s26 = sphi 0, %s33
      %s27 = sphi 0, %s25
      %s28 = sphi 0, %s26
      %s29 = sphi 0, %s27
      %s30 = sphi 0, %s28
      %s40 = sphi 0, %s42
      %s43 = sphi 0, %s40
      %s44 = sphi 0, %s43
      %s60 = sphi 0, %s44
      %s66 = sphi 0, %s68
      %s69 = sphi 0, %s66
      %s70 = sphi 0, %s69
      %s86 = sphi 0, %s70
      %s92 = sphi 0, %s94
      %s95 = sphi 0, %s92
      %s96 = sphi 0, %s95
      %s112 = sphi 0, %s96
      %s118 = sphi 0, %s120
      %s121 = sphi 0, %s118
      %s122 = sphi 0, %s121
      %s138 = sphi 0, %s122
      %s142 = sphi 0, %s142
      %s144 = sphi 0, %s142
      %s145 = sphi 0, %s144
      %s159 = sphi 0, %s145
      %s165 = sphi 0, %s167
      %s168 = sphi 0, %s165
      %s169 = sphi 0, %s168
      %s185 = sphi 0, %s169
    $region4: #{tpu_custom_call.1} parent=1 // loop_header_branch
      %21 = sbr.rel (%p19) target = $region8
    $region5: #{tpu_custom_call.1} parent=1 // loop_body
      %s23 = ssub.s32 %s18, 1
      %s24 = ssub.s32 %s18, 2
      %s31 = sadd.s32 1, %s26
      %p32 = scmp.ge.s32.totalorder %s31, 1
      %s33 = scalar_select %p32, 0, %s31
      %s34 = sadd.s32 1, %s25
      %s35 = scalar_select %p32, %s34, %s25
      %p36 = scmp.ge.s32.totalorder %s35, 2
      %s37 = scalar_select %p36, 0, %s35
      %s38 = ssub.s32 %s25, %s37
      %p39 = scmp.eq.s32.totalorder %s38, 0
      %s41 = sadd.s32 %s40, 1
      %s42 = scalar_select %p39, %s40, %s41
      %p45 = pneg %p39
      %p46 = scmp.eq.s32.totalorder %s18, 1
      %p47 = por %p45, %p46
      %p48 = scmp.ne.s32.totalorder %s40, %s43
      %p49 = scmp.eq.s32.totalorder %s18, 0
      %p50 = por %p48, %p49
      %p51 = scmp.ne.s32.totalorder %s40, %s43
      %p52 = scmp.eq.s32.totalorder %s23, 1
      %p53 = por %p51, %p52
      %p54 = scmp.ne.s32.totalorder %s43, %s44
      %p55 = scmp.eq.s32.totalorder %s23, 0
      %p56 = por %p54, %p55
      %p57 = scmp.ne.s32.totalorder %s43, %s44
      %p58 = scmp.eq.s32.totalorder %s24, 1
      %p59 = por %p57, %p58
      %p61 = scmp.ne.s32.totalorder %s44, %s60
      %p62 = scmp.eq.s32.totalorder %s24, 0
      %p63 = por %p61, %p62
      %s64 = ssub.s32 %s26, %s33
      %p65 = scmp.eq.s32.totalorder %s64, 0
      %s67 = sadd.s32 %s66, 1
      %s68 = scalar_select %p65, %s66, %s67
      %p71 = pneg %p65
      %p72 = scmp.eq.s32.totalorder %s18, 1
      %p73 = por %p71, %p72
      %p74 = scmp.ne.s32.totalorder %s66, %s69
      %p75 = scmp.eq.s32.totalorder %s18, 0
      %p76 = por %p74, %p75
      %p77 = scmp.ne.s32.totalorder %s66, %s69
      %p78 = scmp.eq.s32.totalorder %s23, 1
      %p79 = por %p77, %p78
      %p80 = scmp.ne.s32.totalorder %s69, %s70
      %p81 = scmp.eq.s32.totalorder %s23, 0
      %p82 = por %p80, %p81
      %p83 = scmp.ne.s32.totalorder %s69, %s70
      %p84 = scmp.eq.s32.totalorder %s24, 1
      %p85 = por %p83, %p84
      %p87 = scmp.ne.s32.totalorder %s70, %s86
      %p88 = scmp.eq.s32.totalorder %s24, 0
      %p89 = por %p87, %p88
      %s90 = ssub.s32 %s26, %s33
      %p91 = scmp.eq.s32.totalorder %s90, 0
      %s93 = sadd.s32 %s92, 1
      %s94 = scalar_select %p91, %s92, %s93
      %p97 = pneg %p91
      %p98 = scmp.eq.s32.totalorder %s18, 1
      %p99 = por %p97, %p98
      %p100 = scmp.ne.s32.totalorder %s92, %s95
      %p101 = scmp.eq.s32.totalorder %s18, 0
      %p102 = por %p100, %p101
      %p103 = scmp.ne.s32.totalorder %s92, %s95
      %p104 = scmp.eq.s32.totalorder %s23, 1
      %p105 = por %p103, %p104
      %p106 = scmp.ne.s32.totalorder %s95, %s96
      %p107 = scmp.eq.s32.totalorder %s23, 0
      %p108 = por %p106, %p107
      %p109 = scmp.ne.s32.totalorder %s95, %s96
      %p110 = scmp.eq.s32.totalorder %s24, 1
      %p111 = por %p109, %p110
      %p113 = scmp.ne.s32.totalorder %s96, %s112
      %p114 = scmp.eq.s32.totalorder %s24, 0
      %p115 = por %p113, %p114
      %s116 = ssub.s32 %s26, %s33
      %p117 = scmp.eq.s32.totalorder %s116, 0
      %s119 = sadd.s32 %s118, 1
      %s120 = scalar_select %p117, %s118, %s119
      %p123 = pneg %p117
      %p124 = scmp.eq.s32.totalorder %s18, 1
      %p125 = por %p123, %p124
      %p126 = scmp.ne.s32.totalorder %s118, %s121
      %p127 = scmp.eq.s32.totalorder %s18, 0
      %p128 = por %p126, %p127
      %p129 = scmp.ne.s32.totalorder %s118, %s121
      %p130 = scmp.eq.s32.totalorder %s23, 1
      %p131 = por %p129, %p130
      %p132 = scmp.ne.s32.totalorder %s121, %s122
      %p133 = scmp.eq.s32.totalorder %s23, 0
      %p134 = por %p132, %p133
      %p135 = scmp.ne.s32.totalorder %s121, %s122
      %p136 = scmp.eq.s32.totalorder %s24, 1
      %p137 = por %p135, %p136
      %p139 = scmp.ne.s32.totalorder %s122, %s138
      %p140 = scmp.eq.s32.totalorder %s24, 0
      %p141 = por %p139, %p140
      %s143 = sadd.s32 %s142, 1
      %p146 = scmp.eq.s32.totalorder %s18, 1
      %p147 = scmp.ne.s32.totalorder %s142, %s144
      %p148 = scmp.eq.s32.totalorder %s18, 0
      %p149 = por %p147, %p148
      %p150 = scmp.ne.s32.totalorder %s142, %s144
      %p151 = scmp.eq.s32.totalorder %s23, 1
      %p152 = por %p150, %p151
      %p153 = scmp.ne.s32.totalorder %s144, %s145
      %p154 = scmp.eq.s32.totalorder %s23, 0
      %p155 = por %p153, %p154
      %p156 = scmp.ne.s32.totalorder %s144, %s145
      %p157 = scmp.eq.s32.totalorder %s24, 1
      %p158 = por %p156, %p157
      %p160 = scmp.ne.s32.totalorder %s145, %s159
      %p161 = scmp.eq.s32.totalorder %s24, 0
      %p162 = por %p160, %p161
      %s163 = ssub.s32 %s25, %s37
      %p164 = scmp.eq.s32.totalorder %s163, 0
      %s166 = sadd.s32 %s165, 1
      %s167 = scalar_select %p164, %s165, %s166
      %p170 = pneg %p164
      %p171 = scmp.eq.s32.totalorder %s18, 1
      %p172 = por %p170, %p171
      %p173 = scmp.ne.s32.totalorder %s165, %s168
      %p174 = scmp.eq.s32.totalorder %s18, 0
      %p175 = por %p173, %p174
      %p176 = scmp.ne.s32.totalorder %s165, %s168
      %p177 = scmp.eq.s32.totalorder %s23, 1
      %p178 = por %p176, %p177
      %p179 = scmp.ne.s32.totalorder %s168, %s169
      %p180 = scmp.eq.s32.totalorder %s23, 0
      %p181 = por %p179, %p180
      %p182 = scmp.ne.s32.totalorder %s168, %s169
      %p183 = scmp.eq.s32.totalorder %s24, 1
      %p184 = por %p182, %p183
      %p186 = scmp.ne.s32.totalorder %s169, %s185
      %p187 = scmp.eq.s32.totalorder %s24, 0
      %p188 = por %p186, %p187
      %p189 = scmp.le.s32.totalorder 1, %s18
      %p190 = scmp.lt.s32.totalorder %s18, 3
      %p191 = pnand %p189, %p190
      %p192 = pneg %p191
      // Predicated region
      $region9: #{tpu_custom_call.1} parent=5 // pred_check
        _
      $region10: #{tpu_custom_call.1} parent=5 // pred_check_branch
        %194 = sbr.rel (%p191) target = $region12
      $region11: #{tpu_custom_call.1} parent=5 // pred_region
        %s195 = ssub.s32 %s18, 1
        // Predicated region
        $region13: #{tpu_custom_call.1} parent=11 // pred_check
          %p196 = pneg %p82
        $region14: #{tpu_custom_call.1} parent=11 // pred_check_branch
          %198 = sbr.rel (%p196) target = $region16
        $region15: #{tpu_custom_call.1} parent=11 // pred_region
          %s200 = ssub.s32 1024, 1024
          %201 = vsyncadd [#allocation7], %s200
          %s202 = smul.addr %s28, 64
          %s203 = scalar_lea.hbm %s1, %s202
          %s204 = sshll.u32 [#allocation6], 4
          %s205 = int_to_ptr.vmem [resolvable:$true] %s204
          %210 = dma.hbm_to_vmem [thread:$0]  %s203, 1024, %s205, [#allocation7], 64, 64, 4
        $region16: #{tpu_custom_call.1} parent=11 // pred_fallthru
          _
        // Predicated region
        $region17: #{tpu_custom_call.1} parent=11 // pred_check
          %p211 = pneg %p108
        $region18: #{tpu_custom_call.1} parent=11 // pred_check_branch
          %213 = sbr.rel (%p211) target = $region20
        $region19: #{tpu_custom_call.1} parent=11 // pred_region
          %p214 = scmp.lt.s32.totalorder %s28, 0
          %s215 = scalar_select %p214, %s28, 0
          %s216 = scalar_lea.vmem %s2, %s215
        $region20: #{tpu_custom_call.1} parent=11 // pred_fallthru
          _
        // Predicated region
        $region21: #{tpu_custom_call.1} parent=11 // pred_check
          %p217 = pneg %p134
        $region22: #{tpu_custom_call.1} parent=11 // pred_check_branch
          %219 = sbr.rel (%p217) target = $region24
        $region23: #{tpu_custom_call.1} parent=11 // pred_region
          %s220 = smul.u32 16, %s28
          %s222 = ssub.s32 1024, 1024
          %223 = vsyncadd [#allocation7], %s222
          %s224 = smul.addr %s220, 64
          %s225 = scalar_lea.hbm %s3, %s224
          %s226 = sshll.u32 [#allocation8], 4
          %s227 = int_to_ptr.vmem [resolvable:$true] %s226
          %232 = dma.hbm_to_vmem [thread:$0]  %s225, 1024, %s227, [#allocation7], 64, 64, 4
        $region24: #{tpu_custom_call.1} parent=11 // pred_fallthru
          _
        // Predicated region
        $region25: #{tpu_custom_call.1} parent=11 // pred_check
          %p233 = pneg %p155
        $region26: #{tpu_custom_call.1} parent=11 // pred_check_branch
          %235 = sbr.rel (%p233) target = $region28
        $region27: #{tpu_custom_call.1} parent=11 // pred_region
          _
        $region28: #{tpu_custom_call.1} parent=11 // pred_fallthru
          _
      $region12: #{tpu_custom_call.1} parent=5 // pred_fallthru
        _
      %p236 = scmp.lt.s32.totalorder %s18, 2
      // Predicated region
      $region29: #{tpu_custom_call.1} parent=5 // pred_check
        %p237 = pneg %p236
      $region30: #{tpu_custom_call.1} parent=5 // pred_check_branch
        %239 = sbr.rel (%p237) target = $region32
      $region31: #{tpu_custom_call.1} parent=5 // pred_region
        // Predicated region
        $region33: #{tpu_custom_call.1} parent=31 // pred_check
          %p240 = pneg %p50
        $region34: #{tpu_custom_call.1} parent=31 // pred_check_branch
          %242 = sbr.rel (%p240) target = $region36
        $region35: #{tpu_custom_call.1} parent=31 // pred_region
          %s243 = sand.u32 %s40, 1
          %s244 = scalar_lea.sflag [#allocation4], %s243
          %s245 = sand.u32 %s40, 1
          %s246 = smul.addr %s245, 4
          %s247 = scalar_lea.vmem [#allocation3], %s246
          %s249 = ssub.s32 64, 64
          %250 = vsyncadd %s244, %s249
          %s251 = smul.addr %s25, 64
          %s252 = scalar_lea.hbm %s0, %s251
          %s254 = sshll.u32 %s247, 4
          %s255 = int_to_ptr.vmem [resolvable:$true] %s254
          %257 = dma.hbm_to_vmem [thread:$0]  %s252, 64, %s255, %s244
        $region36: #{tpu_custom_call.1} parent=31 // pred_fallthru
          _
      $region32: #{tpu_custom_call.1} parent=5 // pred_fallthru
        _
      %p258 = scmp.le.s32.totalorder 1, %s18
      %p259 = scmp.lt.s32.totalorder %s18, 3
      %p260 = pnand %p258, %p259
      %p261 = pneg %p260
      // Predicated region
      $region37: #{tpu_custom_call.1} parent=5 // pred_check
        _
      $region38: #{tpu_custom_call.1} parent=5 // pred_check_branch
        %263 = sbr.rel (%p260) target = $region40
      $region39: #{tpu_custom_call.1} parent=5 // pred_region
        %s264 = ssub.s32 %s18, 1
        %s265 = sand.u32 %s43, 1
        %s266 = scalar_lea.sflag [#allocation4], %s265
        %s267 = sand.u32 %s43, 1
        %s268 = smul.addr %s267, 4
        %s269 = scalar_lea.vmem [#allocation3], %s268
        // Predicated region
        $region41: #{tpu_custom_call.1} parent=39 // pred_check
          %p270 = pneg %p56
        $region42: #{tpu_custom_call.1} parent=39 // pred_check_branch
          %272 = sbr.rel (%p270) target = $region44
        $region43: #{tpu_custom_call.1} parent=39 // pred_region
          %273 = dma.done %s266, 64
        $region44: #{tpu_custom_call.1} parent=39 // pred_fallthru
          _
        // Predicated region
        $region45: #{tpu_custom_call.1} parent=39 // pred_check
          %p274 = pneg %p82
        $region46: #{tpu_custom_call.1} parent=39 // pred_check_branch
          %276 = sbr.rel (%p274) target = $region48
        $region47: #{tpu_custom_call.1} parent=39 // pred_region
          %277 = dma.done [#allocation7], 1024
        $region48: #{tpu_custom_call.1} parent=39 // pred_fallthru
          _
        // Predicated region
        $region49: #{tpu_custom_call.1} parent=39 // pred_check
          %p278 = pneg %p134
        $region50: #{tpu_custom_call.1} parent=39 // pred_check_branch
          %280 = sbr.rel (%p278) target = $region52
        $region51: #{tpu_custom_call.1} parent=39 // pred_region
          %281 = dma.done [#allocation7], 1024
        $region52: #{tpu_custom_call.1} parent=39 // pred_fallthru
          _
        %s282 = sand.u32 %s43, 1
        %s283 = scalar_lea.sflag [#allocation4], %s282
        %s284 = sand.u32 %s43, 1
        %s285 = smul.addr %s284, 4
        %s286 = scalar_lea.vmem [#allocation3], %s285
        %p287 = pneg %p56
        %p288 = pneg %p53
        %p289 = pneg %p82
        %p290 = pneg %p79
        %p291 = scmp.lt.s32.totalorder %s28, 0
        %s292 = scalar_select %p291, %s28, 0
        %s293 = scalar_lea.vmem %s2, %s292
        %p294 = pneg %p108
        %p295 = pneg %p105
        %p296 = pneg %p134
        %p297 = pneg %p131
        %p298 = pneg %p155
        %p299 = pneg %p152
        %p300 = pneg %p181
        %p301 = pneg %p178
        %s302 = sand.u32 %s168, 1
        %s303 = scalar_lea.sflag [#allocation5], %s302
        %s304 = sand.u32 %s168, 1
        %s305 = smul.addr %s304, 8
        %s306 = scalar_lea.vmem [#allocation9], %s305
        %p307 = scmp.lt.s32.totalorder %s28, 0
        %s308 = scalar_select %p307, %s28, 0
        %s309 = scalar_lea.vmem %s2, %s308
        %s310 = smul.u32 16, %s28
        %p312 = scmp.eq.s32.totalorder %s28, 0
        // Predicated region
        $region53: #{tpu_custom_call.1} parent=39 // pred_check
          %p313 = pneg %p312
        $region54: #{tpu_custom_call.1} parent=39 // pred_check_branch
          %315 = sbr.rel (%p313) target = $region56
        $region55: #{tpu_custom_call.1} parent=39 // pred_region
          %316 = vst [vmem:[#allocation2] sm:$0xff] 0.0
        $region56: #{tpu_custom_call.1} parent=39 // pred_fallthru
          _
        %v317 = vld [vmem:[%s269] sm:$0xf]
        %v318 = vld [vmem:[#allocation6] sm:$0xf]
        %v319 = vld [vmem:[#allocation6 + $0x4] sm:$0xf]
        %v320 = vld [vmem:[#allocation6 + $0x8] sm:$0xf]
        %v321 = vld [vmem:[#allocation6 + $0xc] sm:$0xf]
        %v322 = vld [vmem:[#allocation6 + $0x10] sm:$0xf]
        %v323 = vld [vmem:[#allocation6 + $0x14] sm:$0xf]
        %v324 = vld [vmem:[#allocation6 + $0x18] sm:$0xf]
        %v325 = vld [vmem:[#allocation6 + $0x1c] sm:$0xf]
        %v326 = vld [vmem:[#allocation6 + $0x20] sm:$0xf]
        %v327 = vld [vmem:[#allocation6 + $0x24] sm:$0xf]
        %v328 = vld [vmem:[#allocation6 + $0x28] sm:$0xf]
        %v329 = vld [vmem:[#allocation6 + $0x2c] sm:$0xf]
        %v330 = vld [vmem:[#allocation6 + $0x30] sm:$0xf]
        %v331 = vld [vmem:[#allocation6 + $0x34] sm:$0xf]
        %v332 = vld [vmem:[#allocation6 + $0x38] sm:$0xf]
        %v333 = vld [vmem:[#allocation6 + $0x3c] sm:$0xf]
        %v334 = vld [vmem:[%s309] sm:$0x1]
        %v336 = vlaneseq
        %v337 = vshrl.u32 %v336, 7
        %v338 = vsub.s32 0, %v337
        %v339 = vrot.slane %v334, %v338
        %v357 = vunpack.c.l.b16 %v318
        %v358 = vunpack.c.l.b16 %v319
        %v359 = vunpack.c.l.b16 %v320
        %v360 = vunpack.c.l.b16 %v321
        %v361 = vunpack.c.l.b16 %v322
        %v362 = vunpack.c.l.b16 %v323
        %v363 = vunpack.c.l.b16 %v324
        %v364 = vunpack.c.l.b16 %v325
        %v365 = vunpack.c.l.b16 %v326
        %v366 = vunpack.c.l.b16 %v327
        %v367 = vunpack.c.l.b16 %v328
        %v368 = vunpack.c.l.b16 %v329
        %v369 = vunpack.c.l.b16 %v330
        %v370 = vunpack.c.l.b16 %v331
        %v371 = vunpack.c.l.b16 %v332
        %v372 = vunpack.c.l.b16 %v333
        %v373 = vpack.c.b16 %v358, %v357
        %v374 = vpack.c.b16 %v360, %v359
        %v375 = vpack.c.b16 %v362, %v361
        %v376 = vpack.c.b16 %v364, %v363
        %v377 = vpack.c.b16 %v366, %v365
        %v378 = vpack.c.b16 %v368, %v367
        %v379 = vpack.c.b16 %v370, %v369
        %v380 = vpack.c.b16 %v372, %v371
        %389 = vmatprep.subr.bf16.mxu0 0
        %390 = vmatpush1.bf16.msra.mxu0 %v373
        %391 = vmatprep.subr.bf16.mxu0 0
        %392 = vmatpush1.bf16.msra.mxu0 %v374
        %393 = vmatprep.subr.bf16.mxu0 0
        %394 = vmatpush1.bf16.msra.mxu0 %v375
        %395 = vmatprep.subr.bf16.mxu0 0
        %396 = vmatpush1.bf16.msra.mxu0 %v376
        %397 = vmatprep.subr.bf16.mxu0 0
        %398 = vmatpush1.bf16.msra.mxu0 %v377
        %399 = vmatprep.subr.bf16.mxu0 0
        %400 = vmatpush1.bf16.msra.mxu0 %v378
        %401 = vmatprep.subr.bf16.mxu0 0
        %402 = vmatpush1.bf16.msra.mxu0 %v379
        %403 = vmatprep.subr.bf16.mxu0 0
        %404 = vmatpush1.bf16.msra.mxu0 %v380
        %405 = vmatprep.subr.bf16.mxu0 0
        %406 = vmatpush1.bf16.msra.mxu0 0
        %407 = vmatprep.subr.bf16.mxu0 0
        %408 = vmatpush1.bf16.msra.mxu0 0
        %409 = vmatprep.subr.bf16.mxu0 0
        %410 = vmatpush1.bf16.msra.mxu0 0
        %411 = vmatprep.subr.bf16.mxu0 0
        %412 = vmatpush1.bf16.msra.mxu0 0
        %413 = vmatprep.subr.bf16.mxu0 0
        %414 = vmatpush1.bf16.msra.mxu0 0
        %415 = vmatprep.subr.bf16.mxu0 0
        %416 = vmatpush1.bf16.msra.mxu0 0
        %417 = vmatprep.subr.bf16.mxu0 0
        %418 = vmatpush1.bf16.msra.mxu0 0
        %419 = vmatprep.subr.bf16.mxu0 0
        %420 = vmatpush1.bf16.msra.mxu0 0
        %421 = vmatprep.mubr.bf16.mxu0 0
        %422 = vmatmul.mubr.bf16.gmra.mrb[0].mxu0 %v317
        %v423 = vpop.f32.mrb[0].mxu0
        %v424 = vadd.f32 %v339, %v423
        %v425 = vpop.f32.mrb[0].mxu0
        %v426 = vpop.f32.mrb[0].mxu0
        %v427 = vpop.f32.mrb[0].mxu0
        %428 = vdwg.mxu0
        %v429 = vmul.f32 %v424, 0.5
        %v430 = vmul.f32 %v424, 0.044715
        %v431 = vmul.f32 %v430, %v424
        %v432 = vmul.f32 %v431, %v424
        %v433 = vadd.f32 %v424, %v432
        %v434 = vmul.f32 %v433, 0.7978846
        %v435 = vtanh.pop %v434
        %v436 = vadd.f32 %v435, 1.0
        %v437 = vmul.f32 %v429, %v436
        %v438 = vld [vmem:[#allocation2] sm:$0xff]
        %v439 = vpack.c.bf16 %v437, %v437
        %v440 = vld [vmem:[#allocation8] sm:$0xf]
        %v441 = vld [vmem:[#allocation8 + $0x4] sm:$0xf]
        %v442 = vld [vmem:[#allocation8 + $0x8] sm:$0xf]
        %v443 = vld [vmem:[#allocation8 + $0xc] sm:$0xf]
        %v444 = vld [vmem:[#allocation8 + $0x10] sm:$0xf]
        %v445 = vld [vmem:[#allocation8 + $0x14] sm:$0xf]
        %v446 = vld [vmem:[#allocation8 + $0x18] sm:$0xf]
        %v447 = vld [vmem:[#allocation8 + $0x1c] sm:$0xf]
        %v448 = vld [vmem:[#allocation8 + $0x20] sm:$0xf]
        %v449 = vld [vmem:[#allocation8 + $0x24] sm:$0xf]
        %v450 = vld [vmem:[#allocation8 + $0x28] sm:$0xf]
        %v451 = vld [vmem:[#allocation8 + $0x2c] sm:$0xf]
        %v452 = vld [vmem:[#allocation8 + $0x30] sm:$0xf]
        %v453 = vld [vmem:[#allocation8 + $0x34] sm:$0xf]
        %v454 = vld [vmem:[#allocation8 + $0x38] sm:$0xf]
        %v455 = vld [vmem:[#allocation8 + $0x3c] sm:$0xf]
        %v472 = vunpack.c.l.b16 %v440
        %v473 = vunpack.c.l.b16 %v441
        %v474 = vunpack.c.l.b16 %v442
        %v475 = vunpack.c.l.b16 %v443
        %v476 = vunpack.c.l.b16 %v444
        %v477 = vunpack.c.l.b16 %v445
        %v478 = vunpack.c.l.b16 %v446
        %v479 = vunpack.c.l.b16 %v447
        %v480 = vunpack.c.l.b16 %v448
        %v481 = vunpack.c.l.b16 %v449
        %v482 = vunpack.c.l.b16 %v450
        %v483 = vunpack.c.l.b16 %v451
        %v484 = vunpack.c.l.b16 %v452
        %v485 = vunpack.c.l.b16 %v453
        %v486 = vunpack.c.l.b16 %v454
        %v487 = vunpack.c.l.b16 %v455
        %v488 = vpack.c.b16 %v473, %v472
        %v489 = vpack.c.b16 %v475, %v474
        %v490 = vpack.c.b16 %v477, %v476
        %v491 = vpack.c.b16 %v479, %v478
        %v492 = vpack.c.b16 %v481, %v480
        %v493 = vpack.c.b16 %v483, %v482
        %v494 = vpack.c.b16 %v485, %v484
        %v495 = vpack.c.b16 %v487, %v486
        %504 = vmatprep.subr.bf16.mxu0 0
        %505 = vmatpush1.bf16.msra.mxu0 %v488
        %506 = vmatprep.subr.bf16.mxu0 0
        %507 = vmatpush1.bf16.msra.mxu0 %v489
        %508 = vmatprep.subr.bf16.mxu0 0
        %509 = vmatpush1.bf16.msra.mxu0 %v490
        %510 = vmatprep.subr.bf16.mxu0 0
        %511 = vmatpush1.bf16.msra.mxu0 %v491
        %512 = vmatprep.subr.bf16.mxu0 0
        %513 = vmatpush1.bf16.msra.mxu0 %v492
        %514 = vmatprep.subr.bf16.mxu0 0
        %515 = vmatpush1.bf16.msra.mxu0 %v493
        %516 = vmatprep.subr.bf16.mxu0 0
        %517 = vmatpush1.bf16.msra.mxu0 %v494
        %518 = vmatprep.subr.bf16.mxu0 0
        %519 = vmatpush1.bf16.msra.mxu0 %v495
        %520 = vmatprep.subr.bf16.mxu0 0
        %521 = vmatpush1.bf16.msra.mxu0 0
        %522 = vmatprep.subr.bf16.mxu0 0
        %523 = vmatpush1.bf16.msra.mxu0 0
        %524 = vmatprep.subr.bf16.mxu0 0
        %525 = vmatpush1.bf16.msra.mxu0 0
        %526 = vmatprep.subr.bf16.mxu0 0
        %527 = vmatpush1.bf16.msra.mxu0 0
        %528 = vmatprep.subr.bf16.mxu0 0
        %529 = vmatpush1.bf16.msra.mxu0 0
        %530 = vmatprep.subr.bf16.mxu0 0
        %531 = vmatpush1.bf16.msra.mxu0 0
        %532 = vmatprep.subr.bf16.mxu0 0
        %533 = vmatpush1.bf16.msra.mxu0 0
        %534 = vmatprep.subr.bf16.mxu0 0
        %535 = vmatpush1.bf16.msra.mxu0 0
        %536 = vmatprep.mubr.bf16.mxu0 0
        %537 = vmatmul.mubr.bf16.gmra.mrb[0].mxu0 %v439
        %v538 = vpop.f32.mrb[0].mxu0
        %v539 = vadd.f32 0.0, %v538
        %v540 = vpop.f32.mrb[0].mxu0
        %v541 = vpop.f32.mrb[0].mxu0
        %v542 = vpop.f32.mrb[0].mxu0
        %543 = vdwg.mxu0
        %v544 = vadd.f32 %v438, %v539
        %545 = vst [vmem:[#allocation2] sm:$0xff] %v544
        // Predicated region
        $region57: #{tpu_custom_call.1} parent=39 // pred_check
          %p546 = pneg %p312
        $region58: #{tpu_custom_call.1} parent=39 // pred_check_branch
          %548 = sbr.rel (%p546) target = $region60
        $region59: #{tpu_custom_call.1} parent=39 // pred_region
          %v549 = vld [vmem:[#allocation2] sm:$0xff]
          %v550 = vld [vmem:[%s4] sm:$0x1]
          %v552 = vlaneseq
          %v553 = vshrl.u32 %v552, 7
          %v554 = vsub.s32 0, %v553
          %v555 = vrot.slane %v550, %v554
          %v557 = vadd.f32 %v549, %v555
          %558 = vst [vmem:[%s306] sm:$0xff] %v557
        $region60: #{tpu_custom_call.1} parent=39 // pred_fallthru
          _
        %s559 = sand.u32 %s168, 1
        %s560 = scalar_lea.sflag [#allocation5], %s559
        %s561 = sand.u32 %s168, 1
        %s562 = smul.addr %s561, 8
        %s563 = scalar_lea.vmem [#allocation9], %s562
        // Predicated region
        $region61: #{tpu_custom_call.1} parent=39 // pred_check
          %p564 = pneg %p178
        $region62: #{tpu_custom_call.1} parent=39 // pred_check_branch
          %566 = sbr.rel (%p564) target = $region64
        $region63: #{tpu_custom_call.1} parent=39 // pred_region
          %s568 = ssub.s32 128, 128
          %569 = vsyncadd %s560, %s568
          %s570 = smul.addr %s27, 128
          %s571 = scalar_lea.hbm %s5, %s570
          %s573 = sshll.u32 %s563, 4
          %s574 = int_to_ptr.vmem [resolvable:$true] %s573
          %576 = dma.vmem_to_hbm [thread:$0]  %s574, 128, %s571, %s560
        $region64: #{tpu_custom_call.1} parent=39 // pred_fallthru
          _
      $region40: #{tpu_custom_call.1} parent=5 // pred_fallthru
        _
      %p577 = scmp.le.s32.totalorder 2, %s18
      // Predicated region
      $region65: #{tpu_custom_call.1} parent=5 // pred_check
        %p578 = pneg %p577
      $region66: #{tpu_custom_call.1} parent=5 // pred_check_branch
        %580 = sbr.rel (%p578) target = $region68
      $region67: #{tpu_custom_call.1} parent=5 // pred_region
        %s581 = ssub.s32 %s18, 2
        // Predicated region
        $region69: #{tpu_custom_call.1} parent=67 // pred_check
          %p582 = pneg %p184
        $region70: #{tpu_custom_call.1} parent=67 // pred_check_branch
          %584 = sbr.rel (%p582) target = $region72
        $region71: #{tpu_custom_call.1} parent=67 // pred_region
          %s585 = sand.u32 %s169, 1
          %s586 = scalar_lea.sflag [#allocation5], %s585
          %s587 = sand.u32 %s169, 1
          %s588 = smul.addr %s587, 8
          %s589 = scalar_lea.vmem [#allocation9], %s588
          %590 = dma.done %s586, 128
        $region72: #{tpu_custom_call.1} parent=67 // pred_fallthru
          _
      $region68: #{tpu_custom_call.1} parent=5 // pred_fallthru
        _
    $region6: #{tpu_custom_call.1} parent=1 // loop_footer
      %s22 = sadd.s32 1, %s18
    $region7: #{tpu_custom_call.1} parent=1 // loop_footer_branch
      %17 = sbr.rel target = $region3
    $region8: #{tpu_custom_call.1} parent=1 // loop_exit
      _
    %591 = vsyncpa [#allocation4], 1
    %s592 = scalar_lea.sflag [#allocation4], 1
    %593 = vsyncpa %s592, 1
    %594 = vsyncpa [#allocation7], 1
    %595 = vsyncpa [#allocation5], 1
    %s596 = scalar_lea.sflag [#allocation5], 1
    %597 = vsyncpa %s596, 1

</llo_original>
